<compile_context>
chip_gen: v6e
topology: v6e:2x2x1
jax: 0.10.0
libtpu: 0.0.40
codegen_flags: <defaults>
</compile_context>

<pallas_src>
import functools

import jax
import jax.numpy as jnp
from jax.experimental import pallas as pl
from jax.experimental.pallas import tpu as pltpu

IGNORE_VALUE = 255
LOSS_WEIGHT = 1.0

MAX_TILE_P = 65536            # max pixels (lanes) per grid step; multiple of 128
VMEM_BLOCK_BUDGET = 12 << 20  # budget for double-buffered logits+target blocks
VMEM_LIMIT_BYTES = 32 << 20   # scoped VMEM limit (<= physical on v5e/v6e/v7x)
EXP_DTYPE = jnp.bfloat16      # bf16 EUP exp on v6e/v7x; use jnp.float32 on v5e if preferred


def _outer_split(num_t: int, n_batch: int, want_parallel: int = 4) -> int:
    """Smallest divisor d of num_t such that n_batch*d >= want_parallel (megacore)."""
    best = 1
    for d in range(1, num_t + 1):
        if num_t % d == 0:
            best = d
            if n_batch * d >= want_parallel:
                break
    return best


def _ce_partial_kernel(logits_ref, tgt_ref, out_ref, *, ignore_value, hw, tile_p, wp,
                       chunk, n_inner, exp_dtype):
    """Masked cross-entropy partials, accumulated across the arbitrary pixel axis.

    logits_ref: (C, tile_p) — classes on sublanes, pixels on lanes
    tgt_ref:    (1, tile_p) int32 targets
    out_ref:    (2, wp)     accumulator: row 0 = loss sum, row 1 = valid-pixel count
    """
    o = pl.program_id(1)
    k_in = pl.program_id(2)

    @pl.when(k_in == 0)
    def _():
        out_ref[...] = jnp.zeros_like(out_ref)

    c = logits_ref.shape[0]
    tile_idx = o * n_inner + k_in
    pix_base = tile_idx * tile_p

    # hoisted iotas (constant across the chunk loop)
    lane = jax.lax.broadcasted_iota(jnp.int32, (1, chunk), 1)
    cls = jax.lax.broadcasted_iota(jnp.int32, (c, chunk), 0)

    n_chunks = tile_p // chunk

    def body(k, carry):
        loss_acc, cnt_acc, picked_acc = carry
        start = pl.multiple_of(k * chunk, chunk)
        x = logits_ref[:, pl.ds(start, chunk)].astype(jnp.float32)   # (C, chunk)
        t = tgt_ref[:, pl.ds(start, chunk)]                          # (1, chunk)

        # mask: ignore_index + ragged tail of the last pixel tile (no host-side pad)
        pix = pix_base + start + lane
        valid = (t != ignore_value) & (pix < hw)                     # (1, chunk)

        # stable logsumexp over classes; exp in bf16 (EUP), class sum in f32.
        m = jnp.max(x, axis=0, keepdims=True)                        # XLU reduce 1
        e = jnp.exp((x - m).astype(exp_dtype))
        # TODO(synk): optionally route this class reduce through the idle MXU
        #             (jnp.dot(ones((1,C)), e)) to free a second XLU slot.
        se = jnp.sum(e.astype(jnp.float32), axis=0, keepdims=True)   # XLU reduce 2
        lse = m + jnp.log(se)                                        # (1, chunk)

        # deferred "picked = x[target]" reduce: valid folded into the select,
        # accumulated over chunks as a (C, wp) partial with VPU adds.
        sel = jnp.where((cls == t) & valid, x, 0.0)                  # (C, chunk)
        lse_v = jnp.where(valid, lse, 0.0)
        vm = valid.astype(jnp.float32)

        # fold chunk lanes into wp-wide lane groups (128-aligned static slices)
        for g in range(chunk // wp):
            sl = slice(g * wp, (g + 1) * wp)
            loss_acc = loss_acc + lse_v[:, sl]
            cnt_acc = cnt_acc + vm[:, sl]
            picked_acc = picked_acc + sel[:, sl]
        return loss_acc, cnt_acc, picked_acc

    init = (jnp.zeros((1, wp), jnp.float32),
            jnp.zeros((1, wp), jnp.float32),
            jnp.zeros((c, wp), jnp.float32))
    loss_acc, cnt_acc, picked_acc = jax.lax.fori_loop(
        0, n_chunks, body, init, unroll=min(4, n_chunks))

    # ONE class-dim reduce per tile for the gathered-logit term
    picked_row = jnp.sum(picked_acc, axis=0, keepdims=True)          # (1, wp)

    out_ref[0:1, :] += loss_acc - picked_row
    out_ref[1:2, :] += cnt_acc


def cross_entropy_ignore(logits_nchw, labels_nhw, ignore_value, exp_dtype=EXP_DTYPE):
    """F.cross_entropy(logits, labels, reduction='mean', ignore_index=ignore_value)."""
    N, C, H, W = logits_nchw.shape
    hw = H * W
    x = logits_nchw.reshape(N, C, hw)                 # free NCHW view, pixels last (lanes)
    t = labels_nhw.reshape(N, 1, hw).astype(jnp.int32)
    # TODO(synk): carry targets as int16/uint8 and widen in-kernel to shave ~1/C HBM bytes.

    if hw >= 128:
        wp = 128
        cap_budget = max(128, (VMEM_BLOCK_BUDGET // (8 * (C + 1))) // 128 * 128)
        tile_p = min(MAX_TILE_P, cap_budget, (hw // 128) * 128)
        chunk = next(cnd for cnd in (512, 256, 128) if tile_p % cnd == 0)
    else:
        wp = hw                                       # tiny spatial maps: one full block
        tile_p = hw
        chunk = hw

    num_t = pl.cdiv(hw, tile_p)                       # ragged tail masked in-kernel
    n_outer = _outer_split(num_t, N)                  # parallel pixel split (megacore)
    n_inner = num_t // n_outer                        # arbitrary (accumulated) pixel axis

    partials = pl.pallas_call(
        functools.partial(_ce_partial_kernel, ignore_value=int(ignore_value), hw=hw,
                          tile_p=tile_p, wp=wp, chunk=chunk, n_inner=n_inner,
                          exp_dtype=exp_dtype),
        out_shape=jax.ShapeDtypeStruct((N, n_outer, 2, wp), jnp.float32),
        grid=(N, n_outer, n_inner),
        in_specs=[
            pl.BlockSpec((None, C, tile_p), lambda n, o, i: (n, 0, o * n_inner + i)),
            pl.BlockSpec((None, 1, tile_p), lambda n, o, i: (n, 0, o * n_inner + i)),
        ],
        out_specs=pl.BlockSpec((None, None, 2, wp), lambda n, o, i: (n, o, 0, 0)),
        compiler_params=pltpu.CompilerParams(
            dimension_semantics=("parallel", "parallel", "arbitrary"),
            vmem_limit_bytes=VMEM_LIMIT_BYTES),
    )(x, t)

    sums = jnp.sum(partials, axis=(0, 1, 3))          # (2,) -> [loss_sum, valid_count]
    # mean over non-ignored pixels (NaN if none, matching PyTorch)
    return sums[0] / sums[1]


def resize_labels_nearest(labels, out_h, out_w):
    """PIL-style NEAREST resize of integer label maps (N, H0, W0) -> (N, out_h, out_w)."""
    # TODO(synk): verify exact tie-breaking parity with PIL Image.NEAREST for all sizes.
    N, H0, W0 = labels.shape
    ys = jnp.clip(jnp.floor((jnp.arange(out_h, dtype=jnp.float32) + 0.5)
                            * (H0 / out_h)).astype(jnp.int32), 0, H0 - 1)
    xs = jnp.clip(jnp.floor((jnp.arange(out_w, dtype=jnp.float32) + 0.5)
                            * (W0 / out_w)).astype(jnp.int32), 0, W0 - 1)
    flat_idx = (ys[:, None] * W0 + xs[None, :]).reshape(-1)     # single flat gather
    return jnp.take(labels.reshape(N, H0 * W0), flat_idx, axis=1).reshape(N, out_h, out_w)


class DeepLabV2HeadJAX:
    """JAX/Pallas port of DeepLabV2_head: multi-scale CE loss with ignore index."""

    def __init__(self, ignore_value=IGNORE_VALUE, loss_weight=LOSS_WEIGHT,
                 exp_dtype=EXP_DTYPE):
        self.ignore_value = ignore_value
        self.loss_weight = loss_weight
        self.exp_dtype = exp_dtype

    def __call__(self, logits_list, targets, masks=None):
        # logits_list: per-scale logits, each (N, C, H_s, W_s); targets: (N, H0, W0)
        # TODO(synk): masks!=None modulation branch of the original losses() not implemented.
        # TODO(synk): fuse all scales into one pallas_call via PrefetchScalarGridSpec with
        #             per-scale pixel-offset scalars once the producer emits them copy-free.
        iter_loss = jnp.float32(0.0)
        for logit in logits_list:
            H, W = logit.shape[-2:]
            labels_ = resize_labels_nearest(targets, H, W)
            loss = cross_entropy_ignore(logit, labels_, self.ignore_value, self.exp_dtype)
            iter_loss = iter_loss + loss * self.loss_weight
        return {"loss_sem_seg": iter_loss}


def _reference_loss(logits_list, targets, ignore_value, loss_weight):
    """Pure-JAX f32 reference (F.cross_entropy mean + ignore_index semantics)."""
    total = jnp.float32(0.0)
    for logit in logits_list:
        N, C, H, W = logit.shape
        labels_ = resize_labels_nearest(targets, H, W)
        x = jnp.transpose(logit, (0, 2, 3, 1)).reshape(-1, C).astype(jnp.float32)
        t = labels_.reshape(-1)
        lse = jax.nn.logsumexp(x, axis=-1)
        picked = jnp.take_along_axis(x, jnp.clip(t, 0, C - 1)[:, None], axis=-1)[:, 0]
        valid = t != ignore_value
        loss = jnp.sum(jnp.where(valid, lse - picked, 0.0)) / jnp.sum(valid)
        total = total + loss * loss_weight
    return total


if __name__ == "__main__":
    key = jax.random.PRNGKey(0)
    N, C = 2, 8
    scales_hw = [(16, 16), (12, 12), (8, 8)]  # full / 0.75x / 0.5x logits

    logits_list = []
    for (h, w) in scales_hw:
        key, sub = jax.random.split(key)
        logits_list.append(jax.random.normal(sub, (N, C, h, w), dtype=jnp.float32))

    key, sub = jax.random.split(key)
    targets = jax.random.randint(sub, (N, 16, 16), 0, C).astype(jnp.int32)
    key, sub = jax.random.split(key)
    ignore_mask = jax.random.bernoulli(sub, 0.1, (N, 16, 16))
    targets = jnp.where(ignore_mask, IGNORE_VALUE, targets)

    head = DeepLabV2HeadJAX(IGNORE_VALUE, LOSS_WEIGHT)
    out = head(logits_list, targets)
    loss = jax.block_until_ready(out["loss_sem_seg"])

    ref = jax.block_until_ready(
        _reference_loss(logits_list, targets, IGNORE_VALUE, LOSS_WEIGHT))

    assert bool(jnp.isfinite(loss)), "loss is not finite"
    # bf16-EUP exp path trades ~1e-3-level absolute accuracy vs the f32 reference.
    tol = 5e-3 + 2e-3 * abs(float(ref))
    assert abs(float(loss) - float(ref)) <= tol, (float(loss), float(ref))
    print("KERNEL_OK")
</pallas_src>

<mosaic_0001>
module attributes {stable_mosaic.version = 11 : i64} {
  func.func @_ce_partial_kernel(%arg0: i32, %arg1: i32, %arg2: i32, %arg3: memref<1x8x256xf32, #tpu.memory_space<vmem>>, %arg4: memref<1x1x256xi32, #tpu.memory_space<vmem>>, %arg5: memref<1x1x2x128xf32, #tpu.memory_space<vmem>>) attributes {dimension_semantics = [#tpu.dimension_semantics<parallel>, #tpu.dimension_semantics<parallel>, #tpu.dimension_semantics<arbitrary>], iteration_bounds = array<i64: 2, 1, 1>, scalar_prefetch = 0 : i64, scratch_operands = 0 : i64, tpu.core_type = #tpu.core_type<tc>, window_params = [{transform_indices = @transform_0, window_bounds = array<i64: 1, 8, 256>}, {transform_indices = @transform_1, window_bounds = array<i64: 1, 1, 256>}, {transform_indices = @transform_2, window_bounds = array<i64: 1, 1, 2, 128>}]} {
    %c0_i32 = arith.constant 0 : i32
    %0 = arith.cmpi eq, %arg2, %c0_i32 : i32
    %1 = arith.extui %0 : i1 to i32
    %c0_i32_0 = arith.constant 0 : i32
    %2 = arith.cmpi ne, %1, %c0_i32_0 : i32
    scf.if %2 {
      %cst_30 = arith.constant 0.000000e+00 : f32
      %75 = vector.broadcast %cst_30 : f32 to vector<2x128xf32>
      %c0_31 = arith.constant 0 : index
      %c0_32 = arith.constant 0 : index
      %c0_33 = arith.constant 0 : index
      %c0_34 = arith.constant 0 : index
      %76 = vector.load %arg5[%c0_31, %c0_32, %c0_33, %c0_34] : memref<1x1x2x128xf32, #tpu.memory_space<vmem>>, vector<1x1x2x128xf32>
      %77 = vector.shape_cast %76 : vector<1x1x2x128xf32> to vector<2x128xf32>
      %78 = vector.shape_cast %75 : vector<2x128xf32> to vector<1x1x2x128xf32>
      tpu.vector_store %arg5[%c0_31, %c0_32, %c0_33, %c0_34], %78 {strides = array<i32>} : memref<1x1x2x128xf32, #tpu.memory_space<vmem>>, vector<1x1x2x128xf32>,
    } else {
    }
    %c1_i32 = arith.constant 1 : i32
    %3 = arith.muli %arg1, %c1_i32 : i32
    %4 = arith.addi %3, %arg2 : i32
    %c256_i32 = arith.constant 256 : i32
    %5 = arith.muli %4, %c256_i32 : i32
    %6 = tpu.iota {dimensions = array<i32: 1>} : vector<1x256xi32>
    %7 = tpu.iota {dimensions = array<i32: 0>} : vector<8x256xi32>
    %cst = arith.constant 0.000000e+00 : f32
    %8 = vector.broadcast %cst : f32 to vector<1x128xf32>
    %cst_1 = arith.constant 0.000000e+00 : f32
    %9 = vector.broadcast %cst_1 : f32 to vector<1x128xf32>
    %cst_2 = arith.constant 0.000000e+00 : f32
    %10 = vector.broadcast %cst_2 : f32 to vector<8x128xf32>
    %c0_i32_3 = arith.constant 0 : i32
    %c256_i32_4 = arith.constant 256 : i32
    %11 = arith.muli %c0_i32_3, %c256_i32_4 : i32
    %12 = tpu.assume_multiple %11, 256 : i32
    %c0 = arith.constant 0 : index
    %c0_5 = arith.constant 0 : index
    %13 = arith.index_cast %12 : i32 to index
    %14 = vector.load %arg3[%c0, %c0_5, %13] : memref<1x8x256xf32, #tpu.memory_space<vmem>>, vector<1x8x256xf32>
    %15 = vector.shape_cast %14 : vector<1x8x256xf32> to vector<8x256xf32>
    %c0_6 = arith.constant 0 : index
    %c0_7 = arith.constant 0 : index
    %16 = arith.index_cast %12 : i32 to index
    %17 = vector.load %arg4[%c0_6, %c0_7, %16] : memref<1x1x256xi32, #tpu.memory_space<vmem>>, vector<1x1x256xi32>
    %18 = vector.shape_cast %17 : vector<1x1x256xi32> to vector<1x256xi32>
    %19 = arith.addi %5, %12 : i32
    %20 = vector.broadcast %19 : i32 to vector<1x256xi32>
    %21 = arith.addi %20, %6 : vector<1x256xi32>
    %c255_i32 = arith.constant 255 : i32
    %22 = vector.broadcast %c255_i32 : i32 to vector<1x256xi32>
    %23 = arith.cmpi ne, %18, %22 : vector<1x256xi32>
    %c256_i32_8 = arith.constant 256 : i32
    %24 = vector.broadcast %c256_i32_8 : i32 to vector<1x256xi32>
    %25 = arith.cmpi slt, %21, %24 : vector<1x256xi32>
    %26 = arith.andi %23, %25 : vector<1x256xi1>
    %cst_9 = arith.constant dense<0xFF800000> : vector<256xf32>
    %27 = vector.multi_reduction <maximumf>, %15, %cst_9 [0] : vector<8x256xf32> to vector<256xf32>
    %28 = vector.shape_cast %27 : vector<256xf32> to vector<1x256xf32>
    %29 = vector.broadcast %28 : vector<1x256xf32> to vector<8x256xf32>
    %30 = arith.subf %15, %29 : vector<8x256xf32>
    %31 = arith.truncf %30 : vector<8x256xf32> to vector<8x256xbf16>
    %32 = math.exp %31 : vector<8x256xbf16>
    %33 = arith.extf %32 : vector<8x256xbf16> to vector<8x256xf32>
    %cst_10 = arith.constant dense<0.000000e+00> : vector<256xf32>
    %34 = vector.multi_reduction <add>, %33, %cst_10 [0] : vector<8x256xf32> to vector<256xf32>
    %35 = vector.shape_cast %34 : vector<256xf32> to vector<1x256xf32>
    %36 = math.log %35 : vector<1x256xf32>
    %37 = arith.addf %28, %36 : vector<1x256xf32>
    %38 = vector.broadcast %18 : vector<1x256xi32> to vector<8x256xi32>
    %39 = arith.cmpi eq, %7, %38 : vector<8x256xi32>
    %40 = vector.broadcast %26 : vector<1x256xi1> to vector<8x256xi1>
    %41 = arith.andi %39, %40 : vector<8x256xi1>
    %cst_11 = arith.constant 0.000000e+00 : f32
    %42 = vector.broadcast %cst_11 : f32 to vector<8x256xf32>
    %43 = arith.select %41, %15, %42 : vector<8x256xi1>, vector<8x256xf32>
    %cst_12 = arith.constant 0.000000e+00 : f32
    %44 = vector.broadcast %cst_12 : f32 to vector<1x256xf32>
    %45 = arith.select %26, %37, %44 : vector<1x256xi1>, vector<1x256xf32>
    %46 = arith.extui %26 : vector<1x256xi1> to vector<1x256xi32>
    %47 = arith.sitofp %46 : vector<1x256xi32> to vector<1x256xf32>
    %48 = vector.extract_strided_slice %45 {offsets = [0, 0], sizes = [1, 128], strides = [1, 1]} : vector<1x256xf32> to vector<1x128xf32>
    %49 = arith.addf %8, %48 : vector<1x128xf32>
    %50 = vector.extract_strided_slice %47 {offsets = [0, 0], sizes = [1, 128], strides = [1, 1]} : vector<1x256xf32> to vector<1x128xf32>
    %51 = arith.addf %9, %50 : vector<1x128xf32>
    %52 = vector.extract_strided_slice %43 {offsets = [0, 0], sizes = [8, 128], strides = [1, 1]} : vector<8x256xf32> to vector<8x128xf32>
    %53 = arith.addf %10, %52 : vector<8x128xf32>
    %54 = vector.extract_strided_slice %45 {offsets = [0, 128], sizes = [1, 128], strides = [1, 1]} : vector<1x256xf32> to vector<1x128xf32>
    %55 = arith.addf %49, %54 : vector<1x128xf32>
    %56 = vector.extract_strided_slice %47 {offsets = [0, 128], sizes = [1, 128], strides = [1, 1]} : vector<1x256xf32> to vector<1x128xf32>
    %57 = arith.addf %51, %56 : vector<1x128xf32>
    %58 = vector.extract_strided_slice %43 {offsets = [0, 128], sizes = [8, 128], strides = [1, 1]} : vector<8x256xf32> to vector<8x128xf32>
    %59 = arith.addf %53, %58 : vector<8x128xf32>
    %c1_i32_13 = arith.constant 1 : i32
    %cst_14 = arith.constant dense<0.000000e+00> : vector<128xf32>
    %60 = vector.multi_reduction <add>, %59, %cst_14 [0] : vector<8x128xf32> to vector<128xf32>
    %61 = vector.shape_cast %60 : vector<128xf32> to vector<1x128xf32>
    %c0_15 = arith.constant 0 : index
    %c0_16 = arith.constant 0 : index
    %c0_17 = arith.constant 0 : index
    %c0_18 = arith.constant 0 : index
    %62 = vector.load %arg5[%c0_15, %c0_16, %c0_17, %c0_18] : memref<1x1x2x128xf32, #tpu.memory_space<vmem>>, vector<1x1x1x128xf32>
    %63 = vector.shape_cast %62 : vector<1x1x1x128xf32> to vector<1x128xf32>
    %64 = arith.subf %55, %61 : vector<1x128xf32>
    %65 = arith.addf %63, %64 : vector<1x128xf32>
    %c0_19 = arith.constant 0 : index
    %c0_20 = arith.constant 0 : index
    %c0_21 = arith.constant 0 : index
    %c0_22 = arith.constant 0 : index
    %66 = vector.load %arg5[%c0_19, %c0_20, %c0_21, %c0_22] : memref<1x1x2x128xf32, #tpu.memory_space<vmem>>, vector<1x1x1x128xf32>
    %67 = vector.shape_cast %66 : vector<1x1x1x128xf32> to vector<1x128xf32>
    %68 = vector.shape_cast %65 : vector<1x128xf32> to vector<1x1x1x128xf32>
    tpu.vector_store %arg5[%c0_19, %c0_20, %c0_21, %c0_22], %68 {strides = array<i32>} : memref<1x1x2x128xf32, #tpu.memory_space<vmem>>, vector<1x1x1x128xf32>,
    %c0_23 = arith.constant 0 : index
    %c0_24 = arith.constant 0 : index
    %c1 = arith.constant 1 : index
    %c0_25 = arith.constant 0 : index
    %69 = vector.load %arg5[%c0_23, %c0_24, %c1, %c0_25] : memref<1x1x2x128xf32, #tpu.memory_space<vmem>>, vector<1x1x1x128xf32>
    %70 = vector.shape_cast %69 : vector<1x1x1x128xf32> to vector<1x128xf32>
    %71 = arith.addf %70, %57 : vector<1x128xf32>
    %c0_26 = arith.constant 0 : index
    %c0_27 = arith.constant 0 : index
    %c1_28 = arith.constant 1 : index
    %c0_29 = arith.constant 0 : index
    %72 = vector.load %arg5[%c0_26, %c0_27, %c1_28, %c0_29] : memref<1x1x2x128xf32, #tpu.memory_space<vmem>>, vector<1x1x1x128xf32>
    %73 = vector.shape_cast %72 : vector<1x1x1x128xf32> to vector<1x128xf32>
    %74 = vector.shape_cast %71 : vector<1x128xf32> to vector<1x1x1x128xf32>
    tpu.vector_store %arg5[%c0_26, %c0_27, %c1_28, %c0_29], %74 {strides = array<i32>} : memref<1x1x2x128xf32, #tpu.memory_space<vmem>>, vector<1x1x1x128xf32>,
    return
  }
  func.func @transform_0(%arg0: i32, %arg1: i32, %arg2: i32) -> (i32, i32, i32) {
    %c1_i32 = arith.constant 1 : i32
    %0 = arith.muli %arg1, %c1_i32 : i32
    %1 = arith.addi %0, %arg2 : i32
    %c0_i32 = arith.constant 0 : i32
    %c0_i32_0 = arith.constant 0 : i32
    return %arg0, %c0_i32, %1 : i32, i32, i32
  }
  func.func @transform_1(%arg0: i32, %arg1: i32, %arg2: i32) -> (i32, i32, i32) {
    %c1_i32 = arith.constant 1 : i32
    %0 = arith.muli %arg1, %c1_i32 : i32
    %1 = arith.addi %0, %arg2 : i32
    %c0_i32 = arith.constant 0 : i32
    %c0_i32_0 = arith.constant 0 : i32
    return %arg0, %c0_i32, %1 : i32, i32, i32
  }
  func.func @transform_2(%arg0: i32, %arg1: i32, %arg2: i32) -> (i32, i32, i32, i32) {
    %c0_i32 = arith.constant 0 : i32
    %c0_i32_0 = arith.constant 0 : i32
    %c0_i32_1 = arith.constant 0 : i32
    return %arg0, %arg1, %c0_i32, %c0_i32_0 : i32, i32, i32, i32
  }
}

</mosaic_0001>

<llo_original>
// kernel: tpu_custom_call.1
$region0: #{tpu_custom_call.1}
  #allocation0 [shape = 'u32[]', space=smem, size = 0x4, offset = 0x4, fixed_abs, tag = 'smem constant byte address 0x4 - core index']
  #allocation1 [shape = 'u32[144,128]{1,0:T(1,128)}', space=vmem, size = 0x12000, scoped, tag = 'internal scratch']
  %s0 = inlined_call_operand.hbm [shape: f32[2,8,256], index: 0, kind: input, shape index: {}]
  %s1 = inlined_call_operand.hbm [shape: s32[2,1,256], index: 1, kind: input, shape index: {}]
  %s2 = inlined_call_operand.hbm [shape: f32[2,1,2,128], index: 2, kind: output, shape index: {}]
  %s3 = sld [smem:[#allocation0]]
  $region53: #{tpu_custom_call.1} parent=0
    _
  %s5 = ssub.s32 1, %s3
  %s6 = scalar_select 0, %s5, %s3
  $region1: #{tpu_custom_call.1} parent=0
    #allocation2 [shape = 'u8[16384]{0}', space=vmem, size = 0x4000, scoped, tag = 'input window, operand 0']
    #allocation3 [shape = 's32[2]{0}', space=sflag, size = 0x8, scoped, tag = 'scoped memory for tpu_custom_call.1']
    #allocation4 [shape = 's32[2]{0}', space=sflag, size = 0x8, scoped, tag = 'scoped memory for tpu_custom_call.1']
    #allocation5 [shape = 'u8[2048]{0}', space=vmem, size = 0x800, scoped, tag = 'input window, operand 1']
    #allocation6 [shape = 's32[2]{0}', space=sflag, size = 0x8, scoped, tag = 'scoped memory for tpu_custom_call.1']
    #allocation7 [shape = 'u8[2048]{0}', space=vmem, size = 0x800, scoped, tag = 'output window, operand 0']
    %7 = vsyncpa [#allocation3], 0
    %s8 = scalar_lea.sflag [#allocation3], 1
    %9 = vsyncpa %s8, 0
    %10 = vsyncpa [#allocation6], 0
    %s11 = scalar_lea.sflag [#allocation6], 1
    %12 = vsyncpa %s11, 0
    %13 = vsyncpa [#allocation4], 0
    %s14 = scalar_lea.sflag [#allocation4], 1
    %15 = vsyncpa %s14, 0
    loop: start=0, step=1, limit=4
    $region2: #{tpu_custom_call.1} parent=1 // loop_pre_header
      _
    $region3: #{tpu_custom_call.1} parent=1 // loop_header
      %s17 = sphi 0, %s21
      %p18 = scmp.ge.s32.totalorder %s17, 4
      %s24 = sphi 0, %s43
      %s25 = sphi 0, %s39
      %s26 = sphi 0, %s35
      %s27 = sphi 0, %s24
      %s28 = sphi 0, %s25
      %s29 = sphi 0, %s26
      %s30 = sphi 0, %s27
      %s31 = sphi 0, %s28
      %s32 = sphi 0, %s29
      %s50 = sphi 0, %s52
      %s53 = sphi 0, %s50
      %s54 = sphi 0, %s53
      %s70 = sphi 0, %s54
      %s80 = sphi 0, %s82
      %s83 = sphi 0, %s80
      %s84 = sphi 0, %s83
      %s100 = sphi 0, %s84
      %s108 = sphi 0, %s110
      %s111 = sphi 0, %s108
      %s112 = sphi 0, %s111
      %s128 = sphi 0, %s112
    $region4: #{tpu_custom_call.1} parent=1 // loop_header_branch
      %20 = sbr.rel (%p18) target = $region8
    $region5: #{tpu_custom_call.1} parent=1 // loop_body
      %s22 = ssub.s32 %s17, 1
      %s23 = ssub.s32 %s17, 2
      %s33 = sadd.s32 1, %s26
      %p34 = scmp.ge.s32.totalorder %s33, 1
      %s35 = scalar_select %p34, 0, %s33
      %s36 = sadd.s32 1, %s25
      %s37 = scalar_select %p34, %s36, %s25
      %p38 = scmp.ge.s32.totalorder %s37, 1
      %s39 = scalar_select %p38, 0, %s37
      %s40 = sadd.s32 1, %s24
      %s41 = scalar_select %p38, %s40, %s24
      %p42 = scmp.ge.s32.totalorder %s41, 2
      %s43 = scalar_select %p42, 0, %s41
      %s44 = sadd.s32 %s25, %s26
      %s45 = sadd.s32 %s39, %s35
      %s46 = ssub.s32 %s24, %s43
      %s47 = ssub.s32 %s44, %s45
      %s48 = sor.u32 %s46, %s47
      %p49 = scmp.eq.s32.totalorder %s48, 0
      %s51 = sadd.s32 %s50, 1
      %s52 = scalar_select %p49, %s50, %s51
      %p55 = pneg %p49
      %p56 = scmp.eq.s32.totalorder %s17, 1
      %p57 = por %p55, %p56
      %p58 = scmp.ne.s32.totalorder %s50, %s53
      %p59 = scmp.eq.s32.totalorder %s17, 0
      %p60 = por %p58, %p59
      %p61 = scmp.ne.s32.totalorder %s50, %s53
      %p62 = scmp.eq.s32.totalorder %s22, 1
      %p63 = por %p61, %p62
      %p64 = scmp.ne.s32.totalorder %s53, %s54
      %p65 = scmp.eq.s32.totalorder %s22, 0
      %p66 = por %p64, %p65
      %p67 = scmp.ne.s32.totalorder %s53, %s54
      %p68 = scmp.eq.s32.totalorder %s23, 1
      %p69 = por %p67, %p68
      %p71 = scmp.ne.s32.totalorder %s54, %s70
      %p72 = scmp.eq.s32.totalorder %s23, 0
      %p73 = por %p71, %p72
      %s74 = sadd.s32 %s25, %s26
      %s75 = sadd.s32 %s39, %s35
      %s76 = ssub.s32 %s24, %s43
      %s77 = ssub.s32 %s74, %s75
      %s78 = sor.u32 %s76, %s77
      %p79 = scmp.eq.s32.totalorder %s78, 0
      %s81 = sadd.s32 %s80, 1
      %s82 = scalar_select %p79, %s80, %s81
      %p85 = pneg %p79
      %p86 = scmp.eq.s32.totalorder %s17, 1
      %p87 = por %p85, %p86
      %p88 = scmp.ne.s32.totalorder %s80, %s83
      %p89 = scmp.eq.s32.totalorder %s17, 0
      %p90 = por %p88, %p89
      %p91 = scmp.ne.s32.totalorder %s80, %s83
      %p92 = scmp.eq.s32.totalorder %s22, 1
      %p93 = por %p91, %p92
      %p94 = scmp.ne.s32.totalorder %s83, %s84
      %p95 = scmp.eq.s32.totalorder %s22, 0
      %p96 = por %p94, %p95
      %p97 = scmp.ne.s32.totalorder %s83, %s84
      %p98 = scmp.eq.s32.totalorder %s23, 1
      %p99 = por %p97, %p98
      %p101 = scmp.ne.s32.totalorder %s84, %s100
      %p102 = scmp.eq.s32.totalorder %s23, 0
      %p103 = por %p101, %p102
      %s104 = ssub.s32 %s24, %s43
      %s105 = ssub.s32 %s25, %s39
      %s106 = sor.u32 %s104, %s105
      %p107 = scmp.eq.s32.totalorder %s106, 0
      %s109 = sadd.s32 %s108, 1
      %s110 = scalar_select %p107, %s108, %s109
      %p113 = pneg %p107
      %p114 = scmp.eq.s32.totalorder %s17, 1
      %p115 = por %p113, %p114
      %p116 = scmp.ne.s32.totalorder %s108, %s111
      %p117 = scmp.eq.s32.totalorder %s17, 0
      %p118 = por %p116, %p117
      %p119 = scmp.ne.s32.totalorder %s108, %s111
      %p120 = scmp.eq.s32.totalorder %s22, 1
      %p121 = por %p119, %p120
      %p122 = scmp.ne.s32.totalorder %s111, %s112
      %p123 = scmp.eq.s32.totalorder %s22, 0
      %p124 = por %p122, %p123
      %p125 = scmp.ne.s32.totalorder %s111, %s112
      %p126 = scmp.eq.s32.totalorder %s23, 1
      %p127 = por %p125, %p126
      %p129 = scmp.ne.s32.totalorder %s112, %s128
      %p130 = scmp.eq.s32.totalorder %s23, 0
      %p131 = por %p129, %p130
      %p132 = scmp.le.s32.totalorder 1, %s17
      %p133 = scmp.lt.s32.totalorder %s17, 3
      %p134 = pnand %p132, %p133
      %p135 = pneg %p134
      // Predicated region
      $region9: #{tpu_custom_call.1} parent=5 // pred_check
        _
      $region10: #{tpu_custom_call.1} parent=5 // pred_check_branch
        %137 = sbr.rel (%p134) target = $region12
      $region11: #{tpu_custom_call.1} parent=5 // pred_region
        %s138 = ssub.s32 %s17, 1
      $region12: #{tpu_custom_call.1} parent=5 // pred_fallthru
        _
      %p139 = scmp.lt.s32.totalorder %s17, 2
      // Predicated region
      $region13: #{tpu_custom_call.1} parent=5 // pred_check
        %p140 = pneg %p139
      $region14: #{tpu_custom_call.1} parent=5 // pred_check_branch
        %142 = sbr.rel (%p140) target = $region16
      $region15: #{tpu_custom_call.1} parent=5 // pred_region
        // Predicated region
        $region17: #{tpu_custom_call.1} parent=15 // pred_check
          %p143 = pneg %p60
        $region18: #{tpu_custom_call.1} parent=15 // pred_check_branch
          %145 = sbr.rel (%p143) target = $region20
        $region19: #{tpu_custom_call.1} parent=15 // pred_region
          %s146 = sand.u32 %s50, 1
          %s147 = scalar_lea.sflag [#allocation3], %s146
          %s148 = sand.u32 %s50, 1
          %s149 = smul.addr %s148, 16
          %s150 = scalar_lea.vmem [#allocation2], %s149
          %s151 = sadd.s32 %s25, %s26
          %s152 = smul.u32 2, %s151
          %s154 = ssub.s32 256, 256
          %155 = vsyncadd %s147, %s154
          %s156 = smul.addr %s24, 2
          %s157 = sadd.s32 %s152, %s156
          %s158 = smul.addr %s157, 128
          %s159 = scalar_lea.hbm %s0, %s158
          %s161 = sshll.u32 %s150, 4
          %s162 = int_to_ptr.vmem [resolvable:$true] %s161
          %164 = dma.hbm_to_vmem [thread:$0]  %s159, 256, %s162, %s147
        $region20: #{tpu_custom_call.1} parent=15 // pred_fallthru
          _
        // Predicated region
        $region21: #{tpu_custom_call.1} parent=15 // pred_check
          %p165 = pneg %p90
        $region22: #{tpu_custom_call.1} parent=15 // pred_check_branch
          %167 = sbr.rel (%p165) target = $region24
        $region23: #{tpu_custom_call.1} parent=15 // pred_region
          %s168 = sand.u32 %s80, 1
          %s169 = scalar_lea.sflag [#allocation6], %s168
          %s170 = sand.u32 %s80, 1
          %s171 = smul.addr %s170, 2
          %s172 = scalar_lea.vmem [#allocation5], %s171
          %s173 = sadd.s32 %s25, %s26
          %s174 = smul.u32 2, %s173
          %s176 = ssub.s32 32, 32
          %177 = vsyncadd %s169, %s176
          %s178 = smul.addr %s24, 2
          %s179 = sadd.s32 %s174, %s178
          %s180 = smul.addr %s179, 16
          %s181 = scalar_lea.hbm %s1, %s180
          %s183 = sshll.u32 %s172, 4
          %s184 = int_to_ptr.vmem [resolvable:$true] %s183
          %186 = dma.hbm_to_vmem [thread:$0]  %s181, 32, %s184, %s169
        $region24: #{tpu_custom_call.1} parent=15 // pred_fallthru
          _
      $region16: #{tpu_custom_call.1} parent=5 // pred_fallthru
        _
      %p187 = scmp.le.s32.totalorder 1, %s17
      %p188 = scmp.lt.s32.totalorder %s17, 3
      %p189 = pnand %p187, %p188
      %p190 = pneg %p189
      // Predicated region
      $region25: #{tpu_custom_call.1} parent=5 // pred_check
        _
      $region26: #{tpu_custom_call.1} parent=5 // pred_check_branch
        %192 = sbr.rel (%p189) target = $region28
      $region27: #{tpu_custom_call.1} parent=5 // pred_region
        %s193 = ssub.s32 %s17, 1
        %s194 = sand.u32 %s53, 1
        %s195 = scalar_lea.sflag [#allocation3], %s194
        %s196 = sand.u32 %s53, 1
        %s197 = smul.addr %s196, 16
        %s198 = scalar_lea.vmem [#allocation2], %s197
        // Predicated region
        $region29: #{tpu_custom_call.1} parent=27 // pred_check
          %p199 = pneg %p66
        $region30: #{tpu_custom_call.1} parent=27 // pred_check_branch
          %201 = sbr.rel (%p199) target = $region32
        $region31: #{tpu_custom_call.1} parent=27 // pred_region
          %202 = dma.done %s195, 256
        $region32: #{tpu_custom_call.1} parent=27 // pred_fallthru
          _
        %s203 = sand.u32 %s83, 1
        %s204 = scalar_lea.sflag [#allocation6], %s203
        %s205 = sand.u32 %s83, 1
        %s206 = smul.addr %s205, 2
        %s207 = scalar_lea.vmem [#allocation5], %s206
        // Predicated region
        $region33: #{tpu_custom_call.1} parent=27 // pred_check
          %p208 = pneg %p96
        $region34: #{tpu_custom_call.1} parent=27 // pred_check_branch
          %210 = sbr.rel (%p208) target = $region36
        $region35: #{tpu_custom_call.1} parent=27 // pred_region
          %211 = dma.done %s204, 32
        $region36: #{tpu_custom_call.1} parent=27 // pred_fallthru
          _
        %s212 = sand.u32 %s53, 1
        %s213 = scalar_lea.sflag [#allocation3], %s212
        %s214 = sand.u32 %s53, 1
        %s215 = smul.addr %s214, 16
        %s216 = scalar_lea.vmem [#allocation2], %s215
        %p217 = pneg %p66
        %p218 = pneg %p63
        %s219 = sand.u32 %s83, 1
        %s220 = scalar_lea.sflag [#allocation6], %s219
        %s221 = sand.u32 %s83, 1
        %s222 = smul.addr %s221, 2
        %s223 = scalar_lea.vmem [#allocation5], %s222
        %p224 = pneg %p96
        %p225 = pneg %p93
        %p226 = pneg %p124
        %p227 = pneg %p121
        %s228 = sand.u32 %s111, 1
        %s229 = scalar_lea.sflag [#allocation4], %s228
        %s230 = sand.u32 %s111, 1
        %s231 = smul.addr %s230, 2
        %s232 = scalar_lea.vmem [#allocation7], %s231
        %s233 = sadd.s32 %s28, %s29
        %s234 = smul.u32 2, %s233
        %s235 = sadd.s32 %s28, %s29
        %s236 = smul.u32 2, %s235
        %p237 = scmp.eq.s32.totalorder %s29, 0
        // Predicated region
        $region37: #{tpu_custom_call.1} parent=27 // pred_check
          %p238 = pneg %p237
        $region38: #{tpu_custom_call.1} parent=27 // pred_check_branch
          %240 = sbr.rel (%p238) target = $region40
        $region39: #{tpu_custom_call.1} parent=27 // pred_region
          %241 = vst [vmem:[%s232] sm:$0x3] 0.0
        $region40: #{tpu_custom_call.1} parent=27 // pred_fallthru
          _
        %s242 = sadd.s32 %s28, %s29
        %s243 = smul.u32 %s242, 256
        %v244 = vlaneseq
        %v245 = vand.u32 %v244, 127
        %v246 = vadd.s32 %v245, 128
        %v247 = vlaneseq
        %v248 = vshrl.u32 %v247, 7
        %v249 = vld [vmem:[%s198] sm:$0xff]
        %v250 = vld [vmem:[%s198 + $0x8] sm:$0xff]
        %v251 = vld [vmem:[%s207] sm:$0x3]
        %s252 = sadd.s32 %s243, 0
        %v253 = vstv %s252
        %v254 = vadd.s32 %v253, %v245
        %v255 = vadd.s32 %v253, %v246
        %vm256 = vcmp.ne.s32.totalorder %v251, 255
        %vm257 = vcmp.lt.s32.totalorder %v254, 256
        %vm258 = vcmp.lt.s32.totalorder %v255, 256
        %v259 = vsel %vm257, 1, 0
        %v260 = vsel %vm258, 1, 0
        %v261 = vcombine.low %v259, %v260
        %v263 = vunpack.c.l.s4 1966171168
        %v264 = vunpack.c.0.s8 %v263
        %v265 = vlaneseq
        %v266 = vshrl.u32 %v265, 7
        %v267 = vsub.s32 %v264, %v266
        %v268 = vrot.slane %v261, %v267
        %v270 = vunpack.c.l.s4 1966171168
        %v271 = vunpack.c.0.s8 %v270
        %v272 = vlaneseq
        %v273 = vshrl.u32 %v272, 7
        %v274 = vsub.s32 %v271, %v273
        %v275 = vrot.slane %v268, %v274
        %vm276 = vcmp.ne.s32.totalorder %v275, 0
        %vm277 = vmand %vm256, %vm276
        %v278 = vrot.slane %v249, 4
        %v279 = vmax.f32 %v249, %v278
        %v280 = vrot.slane %v279, 2
        %v281 = vmax.f32 %v279, %v280
        %v282 = vrot.slane %v281, 1
        %v283 = vmax.f32 %v281, %v282
        %v284 = vrot.slane %v250, 4
        %v285 = vmax.f32 %v250, %v284
        %v286 = vrot.slane %v285, 2
        %v287 = vmax.f32 %v285, %v286
        %v288 = vrot.slane %v287, 1
        %v289 = vmax.f32 %v287, %v288
        %v290 = vsub.f32 %v249, %v283
        %v291 = vsub.f32 %v250, %v289
        %v292 = vpack.c.bf16 %v290, %v290
        %v293 = vpack.c.bf16 %v291, %v291
        %v295 = vmul.bf16 %v292, 1069105081
        %v296 = vpow.bf16.pop %v295
        %v298 = vmul.bf16 %v293, 1069105081
        %v299 = vpow.bf16.pop %v298
        %v300 = vunpack.c.l.bf16 %v296
        %v301 = vunpack.c.l.bf16 %v299
        %v302 = vrot.slane %v300, 4
        %v303 = vadd.f32 %v300, %v302
        %v304 = vrot.slane %v303, 2
        %v305 = vadd.f32 %v303, %v304
        %v306 = vrot.slane %v305, 1
        %v307 = vadd.f32 %v305, %v306
        %v308 = vrot.slane %v301, 4
        %v309 = vadd.f32 %v301, %v308
        %v310 = vrot.slane %v309, 2
        %v311 = vadd.f32 %v309, %v310
        %v312 = vrot.slane %v311, 1
        %v313 = vadd.f32 %v311, %v312
        %v314 = vlog2.pop %v307
        %v315 = vmul.f32 %v314, 0.6931472
        %v316 = vlog2.pop %v313
        %v317 = vmul.f32 %v316, 0.6931472
        %v318 = vadd.f32 %v283, %v315
        %v319 = vadd.f32 %v289, %v317
        %v320 = vlaneseq
        %v321 = vshrl.u32 %v320, 7
        %v322 = vsub.s32 0, %v321
        %v323 = vrot.slane %v251, %v322
        %v324 = vlaneseq
        %v325 = vshrl.u32 %v324, 7
        %v326 = vsub.s32 1, %v325
        %v327 = vrot.slane %v251, %v326
        %vm328 = vcmp.eq.s32.totalorder %v248, %v323
        %vm329 = vcmp.eq.s32.totalorder %v248, %v327
        %v330 = vsel %vm277, 1, 0
        %v331 = vlaneseq
        %v332 = vshrl.u32 %v331, 7
        %v333 = vsub.s32 0, %v332
        %v334 = vrot.slane %v330, %v333
        %v335 = vlaneseq
        %v336 = vshrl.u32 %v335, 7
        %v337 = vsub.s32 1, %v336
        %v338 = vrot.slane %v330, %v337
        %vm339 = vcmp.eq.s32.totalorder %v334, 1
        %vm340 = vcmp.eq.s32.totalorder %v338, 1
        %vm341 = vmand %vm328, %vm339
        %vm342 = vmand %vm329, %vm340
        %v343 = vsel %vm341, %v249, 0.0
        %v344 = vsel %vm342, %v250, 0.0
        %v347 = vcombine.low %v318, %v319
        %v349 = vunpack.c.l.s4 1966171168
        %v350 = vunpack.c.0.s8 %v349
        %v351 = vlaneseq
        %v352 = vshrl.u32 %v351, 7
        %v353 = vsub.s32 %v350, %v352
        %v354 = vrot.slane %v347, %v353
        %v356 = vunpack.c.l.s4 1966171168
        %v357 = vunpack.c.0.s8 %v356
        %v358 = vlaneseq
        %v359 = vshrl.u32 %v358, 7
        %v360 = vsub.s32 %v357, %v359
        %v361 = vrot.slane %v354, %v360
        %v363 = vsel %vm277, %v361, 0.0
        %v364 = vcvt.s32.f32 %v330
        %v365 = vadd.f32 %v363, 0.0
        %v366 = vadd.f32 %v364, 0.0
        %v367 = vadd.f32 %v343, 0.0
        %v369 = vrot.slane %v363, 1
        %v371 = vadd.f32 %v365, %v369
        %v373 = vrot.slane %v364, 1
        %v375 = vadd.f32 %v366, %v373
        %v376 = vadd.f32 %v367, %v344
        %v377 = vrot.slane %v376, 4
        %v378 = vadd.f32 %v376, %v377
        %v379 = vrot.slane %v378, 2
        %v380 = vadd.f32 %v378, %v379
        %v381 = vrot.slane %v380, 1
        %v382 = vadd.f32 %v380, %v381
        %v383 = vld [vmem:[%s232] sm:$0x1]
        %v384 = vsub.f32 %v371, %v382
        %v385 = vadd.f32 %v383, %v384
        %386 = vst [vmem:[%s232] sm:$0x1] %v385
        %v387 = vld [vmem:[%s232 + $0x1] sm:$0x1]
        %v388 = vadd.f32 %v387, %v375
        %389 = vst [vmem:[%s232 + $0x1] sm:$0x1] %v388
        %s390 = sand.u32 %s111, 1
        %s391 = scalar_lea.sflag [#allocation4], %s390
        %s392 = sand.u32 %s111, 1
        %s393 = smul.addr %s392, 2
        %s394 = scalar_lea.vmem [#allocation7], %s393
        // Predicated region
        $region41: #{tpu_custom_call.1} parent=27 // pred_check
          %p395 = pneg %p121
        $region42: #{tpu_custom_call.1} parent=27 // pred_check_branch
          %397 = sbr.rel (%p395) target = $region44
        $region43: #{tpu_custom_call.1} parent=27 // pred_region
          %s399 = ssub.s32 32, 32
          %400 = vsyncadd %s391, %s399
          %s401 = sadd.s32 %s28, %s27
          %s402 = smul.addr %s401, 32
          %s403 = scalar_lea.hbm %s2, %s402
          %s405 = sshll.u32 %s394, 4
          %s406 = int_to_ptr.vmem [resolvable:$true] %s405
          %408 = dma.vmem_to_hbm [thread:$0]  %s406, 32, %s403, %s391
        $region44: #{tpu_custom_call.1} parent=27 // pred_fallthru
          _
      $region28: #{tpu_custom_call.1} parent=5 // pred_fallthru
        _
      %p409 = scmp.le.s32.totalorder 2, %s17
      // Predicated region
      $region45: #{tpu_custom_call.1} parent=5 // pred_check
        %p410 = pneg %p409
      $region46: #{tpu_custom_call.1} parent=5 // pred_check_branch
        %412 = sbr.rel (%p410) target = $region48
      $region47: #{tpu_custom_call.1} parent=5 // pred_region
        %s413 = ssub.s32 %s17, 2
        // Predicated region
        $region49: #{tpu_custom_call.1} parent=47 // pred_check
          %p414 = pneg %p127
        $region50: #{tpu_custom_call.1} parent=47 // pred_check_branch
          %416 = sbr.rel (%p414) target = $region52
        $region51: #{tpu_custom_call.1} parent=47 // pred_region
          %s417 = sand.u32 %s112, 1
          %s418 = scalar_lea.sflag [#allocation4], %s417
          %s419 = sand.u32 %s112, 1
          %s420 = smul.addr %s419, 2
          %s421 = scalar_lea.vmem [#allocation7], %s420
          %422 = dma.done %s418, 32
        $region52: #{tpu_custom_call.1} parent=47 // pred_fallthru
          _
      $region48: #{tpu_custom_call.1} parent=5 // pred_fallthru
        _
    $region6: #{tpu_custom_call.1} parent=1 // loop_footer
      %s21 = sadd.s32 1, %s17
    $region7: #{tpu_custom_call.1} parent=1 // loop_footer_branch
      %16 = sbr.rel target = $region3
    $region8: #{tpu_custom_call.1} parent=1 // loop_exit
      _
    %423 = vsyncpa [#allocation3], 1
    %s424 = scalar_lea.sflag [#allocation3], 1
    %425 = vsyncpa %s424, 1
    %426 = vsyncpa [#allocation6], 1
    %s427 = scalar_lea.sflag [#allocation6], 1
    %428 = vsyncpa %s427, 1
    %429 = vsyncpa [#allocation4], 1
    %s430 = scalar_lea.sflag [#allocation4], 1
    %431 = vsyncpa %s430, 1

</llo_original>
